<compile_context>
chip_gen: v7x
topology: tpu7x:2x2x1
jax: 0.10.0
libtpu: 0.0.40
codegen_flags: <defaults>
</compile_context>

<pallas_src>
import functools

import jax
import jax.numpy as jnp
from jax.experimental import pallas as pl
from jax.experimental.pallas import tpu as pltpu


def _channel_attention_kernel(x_ref, w1t_ref, w2t_ref, o_ref, sum_acc, max_acc,
                              *, S, S_TILE, CHUNK, inv_S, has_tail):
    # x_ref   : (B_TILE, C, S_TILE)   native dtype
    # w1t_ref : (C, Cr)  f32          fc1 weight, squeezed & transposed
    # w2t_ref : (Cr, C)  f32          fc2 weight, squeezed & transposed
    # o_ref   : (1, B_TILE, C)        native dtype
    # sum_acc : (B_TILE, C, CHUNK)    f32 VMEM scratch (lane-partial sums)
    # max_acc : (B_TILE, C, CHUNK)    native-dtype VMEM scratch (lane-partial maxes)
    k = pl.program_id(1)
    last = pl.num_programs(1) - 1
    n_chunks = S_TILE // CHUNK

    @pl.when(k == 0)
    def _():
        sum_acc[...] = jnp.zeros_like(sum_acc)
        max_acc[...] = jnp.full_like(max_acc, -jnp.inf)

    def accumulate(mask_tail):
        s_acc = sum_acc[...]
        m_acc = max_acc[...]
        # Static 128-lane chunks: whole-vreg slices, pure VALU adds/maxes into
        # the lane-partial accumulators. No XLU work in the steady state.
        for j in range(n_chunks):
            chunk = x_ref[:, :, j * CHUNK:(j + 1) * CHUNK]      # (B_TILE, C, CHUNK)
            if mask_tail:
                base = k * S_TILE + j * CHUNK
                idx = jax.lax.broadcasted_iota(jnp.int32, chunk.shape, 2) + base
                valid = idx < S
                c_sum = jnp.where(valid, chunk, 0).astype(jnp.float32)
                c_max = jnp.where(valid, chunk, -jnp.inf)
            else:
                c_sum = chunk.astype(jnp.float32)
                c_max = chunk
            s_acc = s_acc + c_sum
            m_acc = jnp.maximum(m_acc, c_max.astype(m_acc.dtype))
        sum_acc[...] = s_acc
        max_acc[...] = m_acc

    if has_tail:
        # Masking (iota + where) only on the final spatial tile.
        @pl.when(k != last)
        def _():
            accumulate(False)

        @pl.when(k == last)
        def _():
            accumulate(True)
    else:
        accumulate(False)

    @pl.when(k == last)
    def _():
        # Single cross-lane reduce of the partial accumulators, then the fused
        # shared MLP: one fc1 matmul + one fc2 matmul on the stacked operand.
        avg = jnp.sum(sum_acc[...], axis=-1) * inv_S                      # (B_TILE, C)
        mx = jnp.max(max_acc[...], axis=-1).astype(jnp.float32)           # (B_TILE, C)
        pooled = jnp.concatenate([avg, mx], axis=0)                       # (2*B_TILE, C)
        h = jnp.dot(pooled, w1t_ref[...], preferred_element_type=jnp.float32)
        h = jnp.maximum(h, 0.0)
        y = jnp.dot(h, w2t_ref[...], preferred_element_type=jnp.float32)
        bt = avg.shape[0]
        out = jax.nn.sigmoid(y[:bt, :] + y[bt:, :])                       # avg + max branch
        o_ref[0] = out.astype(o_ref.dtype)


def _pick_b_tile(B, C, min_lanes, dtype_bytes, in_buf_bytes):
    """Largest divisor of B that (a) leaves num_b >= 2 when B >= 2 (v7x: both
    TensorCores stream), (b) caps at 8, (c) keeps even the minimal 128-lane
    input tile within the per-buffer VMEM budget (v5e robustness)."""
    cap = 8 if B == 1 else min(8, max(1, B // 2))
    candidates = [d for d in range(cap, 0, -1) if B % d == 0] or [1]
    for bt in candidates:
        if bt * C * min_lanes * dtype_bytes <= in_buf_bytes:
            return bt
    return candidates[-1]


def channel_attention(x_nchw, w1, w2, *, s_tile=None,
                      in_buf_bytes=12 * 1024 * 1024):
    """x_nchw: (B, C, H, W); w1: (Cr, C, 1, 1); w2: (C, Cr, 1, 1). Returns (B, C, 1, 1)."""
    B, C, H, W = x_nchw.shape
    Cr = w1.shape[0]
    S = H * W
    dtype = x_nchw.dtype
    dtype_bytes = jnp.dtype(dtype).itemsize

    # ---- tiling ----------------------------------------------------------
    min_lanes = 128 if S >= 128 else S
    B_TILE = _pick_b_tile(B, C, min_lanes, dtype_bytes, in_buf_bytes)
    num_b = B // B_TILE                                    # exact: no batch padding

    if S < 128:
        S_TILE = S
        CHUNK = S
    else:
        CHUNK = 128
        if s_tile is None:
            lanes_budget = in_buf_bytes // (B_TILE * C * dtype_bytes)
            S_TILE = max(128, (lanes_budget // 128) * 128)
        else:
            S_TILE = max(128, (s_tile // 128) * 128)
        S_TILE = min(S_TILE, ((S + 127) // 128) * 128)     # never exceed round_up(S, 128)

    num_s = pl.cdiv(S, S_TILE)
    has_tail = (S % S_TILE) != 0

    # ---- operand prep (no HBM copies: reshape only, native dtype) --------
    x_flat = x_nchw.reshape(B, C, S)
    w1t = jnp.transpose(w1.reshape(Cr, C)).astype(jnp.float32)  # (C, Cr)
    w2t = jnp.transpose(w2.reshape(C, Cr)).astype(jnp.float32)  # (Cr, C)

    kernel = functools.partial(
        _channel_attention_kernel,
        S=S, S_TILE=S_TILE, CHUNK=CHUNK, inv_S=1.0 / float(S), has_tail=has_tail)

    grid_spec = pltpu.PrefetchScalarGridSpec(
        num_scalar_prefetch=0,
        grid=(num_b, num_s),
        in_specs=[
            # x: stream spatial tiles along the trailing (reduction) grid axis.
            pl.BlockSpec((B_TILE, C, S_TILE), lambda i, k: (i, 0, k)),
            # weights: constant index_map + single-buffered -> resident, no
            # dead double-buffer VMEM.
            pl.BlockSpec((C, Cr), lambda i, k: (0, 0),
                         pipeline_mode=pl.Buffered(1)),
            pl.BlockSpec((Cr, C), lambda i, k: (0, 0),
                         pipeline_mode=pl.Buffered(1)),
        ],
        # Output laid out (num_b, B_TILE, C): the block always spans full
        # trailing dims, so any B_TILE (incl. 1) satisfies layout rules.
        out_specs=pl.BlockSpec((1, B_TILE, C), lambda i, k: (i, 0, 0)),
        scratch_shapes=[
            pltpu.VMEM((B_TILE, C, CHUNK), jnp.float32),   # lane-partial running sum
            pltpu.VMEM((B_TILE, C, CHUNK), dtype),          # lane-partial running max
        ],
    )

    # ---- explicit VMEM budget (v7x has only 64 MiB physical) -------------
    x_buf = B_TILE * C * S_TILE * dtype_bytes
    w_buf = 2 * C * Cr * 4
    acc_buf = B_TILE * C * CHUNK * (4 + dtype_bytes)
    out_buf = 2 * B_TILE * C * dtype_bytes
    footprint = 2 * x_buf + w_buf + acc_buf + out_buf
    vmem_limit = max(int(footprint * 1.3) + (2 << 20), 20 << 20)
    vmem_limit = min(vmem_limit, 56 << 20)

    cost = pl.CostEstimate(
        flops=int(2 * B * C * S + 4 * (2 * B) * C * Cr),
        transcendentals=int(B * C),
        bytes_accessed=int(B * C * S * dtype_bytes + B * C * dtype_bytes + 2 * C * Cr * 4),
    )

    out = pl.pallas_call(
        kernel,
        out_shape=jax.ShapeDtypeStruct((num_b, B_TILE, C), dtype),
        grid_spec=grid_spec,
        compiler_params=pltpu.CompilerParams(
            dimension_semantics=("parallel", "arbitrary"),
            vmem_limit_bytes=vmem_limit,
        ),
        cost_estimate=cost,
    )(x_flat, w1t, w2t)

    return out.reshape(B, C, 1, 1)


def channel_attention_ref(x_nchw, w1, w2):
    """Pure-JAX reference mirroring the PyTorch forward."""
    B, C, H, W = x_nchw.shape
    Cr = w1.shape[0]
    xf = x_nchw.astype(jnp.float32)
    avg = jnp.mean(xf, axis=(2, 3))              # (B, C)
    mx = jnp.max(xf, axis=(2, 3))                # (B, C)
    w1m = w1.reshape(Cr, C).astype(jnp.float32)
    w2m = w2.reshape(C, Cr).astype(jnp.float32)

    def mlp(p):
        return jnp.maximum(p @ w1m.T, 0.0) @ w2m.T

    out = jax.nn.sigmoid(mlp(avg) + mlp(mx))
    return out.astype(x_nchw.dtype).reshape(B, C, 1, 1)


if __name__ == "__main__":
    # Small shapes consistent with the module: ratio=8 => C >= 8.
    # W=17 makes S=272 (not a multiple of 128) so the masked-tail path is
    # exercised; s_tile=256 forces 2 spatial steps (one steady, one masked)
    # with 2 chunks per step. B=2 -> B_TILE=1, 2 parallel batch blocks.
    B, C, H, W = 2, 32, 16, 17
    ratio = 8
    Cr = C // ratio

    key = jax.random.PRNGKey(0)
    kx, k1, k2 = jax.random.split(key, 3)

    x = jax.random.normal(kx, (B, C, H, W), dtype=jnp.float32)
    # Deterministic synthetic weights (conv-shaped, bias-free, like nn.Conv2d(..., 1, bias=False)).
    w1 = jax.random.normal(k1, (Cr, C, 1, 1), dtype=jnp.float32) * 0.1
    w2 = jax.random.normal(k2, (C, Cr, 1, 1), dtype=jnp.float32) * 0.1

    ref = channel_attention_ref(x, w1, w2)

    # Multi-step streaming path (steady step + masked tail step).
    out = jax.block_until_ready(channel_attention(x, w1, w2, s_tile=256))
    assert out.shape == (B, C, 1, 1)
    assert jnp.allclose(out, ref, atol=1e-5, rtol=1e-5), "mismatch vs reference (streaming)"

    # Default single-tile path (whole spatial extent in one masked tile).
    out2 = jax.block_until_ready(channel_attention(x, w1, w2))
    assert jnp.allclose(out2, ref, atol=1e-5, rtol=1e-5), "mismatch vs reference (single tile)"

    print("KERNEL_OK")
</pallas_src>

<mosaic_0001>
module attributes {stable_mosaic.version = 11 : i64} {
  func.func @_channel_attention_kernel(%arg0: i32, %arg1: i32, %arg2: memref<1x32x256xf32, #tpu.memory_space<vmem>>, %arg3: memref<32x4xf32, #tpu.memory_space<vmem>>, %arg4: memref<4x32xf32, #tpu.memory_space<vmem>>, %arg5: memref<1x1x32xf32, #tpu.memory_space<vmem>>, %arg6: memref<1x32x128xf32, #tpu.memory_space<vmem>>, %arg7: memref<1x32x128xf32, #tpu.memory_space<vmem>>) attributes {dimension_semantics = [#tpu.dimension_semantics<parallel>, #tpu.dimension_semantics<arbitrary>], iteration_bounds = array<i64: 2, 2>, scalar_prefetch = 0 : i64, scratch_operands = 2 : i64, tpu.core_type = #tpu.core_type<tc>, window_params = [{transform_indices = @transform_0, window_bounds = array<i64: 1, 32, 256>}, {pipeline_mode = #tpu.pipeline_mode<synchronous>, transform_indices = @transform_1, window_bounds = array<i64: 32, 4>}, {pipeline_mode = #tpu.pipeline_mode<synchronous>, transform_indices = @transform_2, window_bounds = array<i64: 4, 32>}, {transform_indices = @transform_3, window_bounds = array<i64: 1, 1, 32>}]} {
    %c0_i32 = arith.constant 0 : i32
    %0 = arith.cmpi eq, %arg1, %c0_i32 : i32
    %1 = arith.extui %0 : i1 to i32
    %c0_i32_0 = arith.constant 0 : i32
    %2 = arith.cmpi ne, %1, %c0_i32_0 : i32
    scf.if %2 {
      %cst = arith.constant 0.000000e+00 : f32
      %12 = vector.broadcast %cst : f32 to vector<1x32x128xf32>
      %c0 = arith.constant 0 : index
      %c0_6 = arith.constant 0 : index
      %c0_7 = arith.constant 0 : index
      %13 = vector.load %arg6[%c0, %c0_6, %c0_7] : memref<1x32x128xf32, #tpu.memory_space<vmem>>, vector<1x32x128xf32>
      tpu.vector_store %arg6[%c0, %c0_6, %c0_7], %12 {strides = array<i32>} : memref<1x32x128xf32, #tpu.memory_space<vmem>>, vector<1x32x128xf32>,
      %cst_8 = arith.constant 0xFF800000 : f32
      %14 = vector.broadcast %cst_8 : f32 to vector<1x32x128xf32>
      %c0_9 = arith.constant 0 : index
      %c0_10 = arith.constant 0 : index
      %c0_11 = arith.constant 0 : index
      %15 = vector.load %arg7[%c0_9, %c0_10, %c0_11] : memref<1x32x128xf32, #tpu.memory_space<vmem>>, vector<1x32x128xf32>
      tpu.vector_store %arg7[%c0_9, %c0_10, %c0_11], %14 {strides = array<i32>} : memref<1x32x128xf32, #tpu.memory_space<vmem>>, vector<1x32x128xf32>,
    } else {
    }
    %c1_i32 = arith.constant 1 : i32
    %3 = arith.cmpi ne, %arg1, %c1_i32 : i32
    %4 = arith.extui %3 : i1 to i32
    %c0_i32_1 = arith.constant 0 : i32
    %5 = arith.cmpi ne, %4, %c0_i32_1 : i32
    scf.if %5 {
      %c0 = arith.constant 0 : index
      %c0_6 = arith.constant 0 : index
      %c0_7 = arith.constant 0 : index
      %12 = vector.load %arg6[%c0, %c0_6, %c0_7] : memref<1x32x128xf32, #tpu.memory_space<vmem>>, vector<1x32x128xf32>
      %c0_8 = arith.constant 0 : index
      %c0_9 = arith.constant 0 : index
      %c0_10 = arith.constant 0 : index
      %13 = vector.load %arg7[%c0_8, %c0_9, %c0_10] : memref<1x32x128xf32, #tpu.memory_space<vmem>>, vector<1x32x128xf32>
      %c0_11 = arith.constant 0 : index
      %c0_12 = arith.constant 0 : index
      %c0_13 = arith.constant 0 : index
      %14 = vector.load %arg2[%c0_11, %c0_12, %c0_13] : memref<1x32x256xf32, #tpu.memory_space<vmem>>, vector<1x32x128xf32>
      %15 = arith.addf %12, %14 : vector<1x32x128xf32>
      %16 = arith.maximumf %13, %14 : vector<1x32x128xf32>
      %c0_14 = arith.constant 0 : index
      %c0_15 = arith.constant 0 : index
      %c128 = arith.constant 128 : index
      %17 = vector.load %arg2[%c0_14, %c0_15, %c128] : memref<1x32x256xf32, #tpu.memory_space<vmem>>, vector<1x32x128xf32>
      %18 = arith.addf %15, %17 : vector<1x32x128xf32>
      %19 = arith.maximumf %16, %17 : vector<1x32x128xf32>
      %c0_16 = arith.constant 0 : index
      %c0_17 = arith.constant 0 : index
      %c0_18 = arith.constant 0 : index
      %20 = vector.load %arg6[%c0_16, %c0_17, %c0_18] : memref<1x32x128xf32, #tpu.memory_space<vmem>>, vector<1x32x128xf32>
      tpu.vector_store %arg6[%c0_16, %c0_17, %c0_18], %18 {strides = array<i32>} : memref<1x32x128xf32, #tpu.memory_space<vmem>>, vector<1x32x128xf32>,
      %c0_19 = arith.constant 0 : index
      %c0_20 = arith.constant 0 : index
      %c0_21 = arith.constant 0 : index
      %21 = vector.load %arg7[%c0_19, %c0_20, %c0_21] : memref<1x32x128xf32, #tpu.memory_space<vmem>>, vector<1x32x128xf32>
      tpu.vector_store %arg7[%c0_19, %c0_20, %c0_21], %19 {strides = array<i32>} : memref<1x32x128xf32, #tpu.memory_space<vmem>>, vector<1x32x128xf32>,
    } else {
    }
    %c1_i32_2 = arith.constant 1 : i32
    %6 = arith.cmpi eq, %arg1, %c1_i32_2 : i32
    %7 = arith.extui %6 : i1 to i32
    %c0_i32_3 = arith.constant 0 : i32
    %8 = arith.cmpi ne, %7, %c0_i32_3 : i32
    scf.if %8 {
      %c0 = arith.constant 0 : index
      %c0_6 = arith.constant 0 : index
      %c0_7 = arith.constant 0 : index
      %12 = vector.load %arg6[%c0, %c0_6, %c0_7] : memref<1x32x128xf32, #tpu.memory_space<vmem>>, vector<1x32x128xf32>
      %c0_8 = arith.constant 0 : index
      %c0_9 = arith.constant 0 : index
      %c0_10 = arith.constant 0 : index
      %13 = vector.load %arg7[%c0_8, %c0_9, %c0_10] : memref<1x32x128xf32, #tpu.memory_space<vmem>>, vector<1x32x128xf32>
      %c0_11 = arith.constant 0 : index
      %c0_12 = arith.constant 0 : index
      %c0_13 = arith.constant 0 : index
      %14 = vector.load %arg2[%c0_11, %c0_12, %c0_13] : memref<1x32x256xf32, #tpu.memory_space<vmem>>, vector<1x32x128xf32>
      %c256_i32 = arith.constant 256 : i32
      %15 = arith.muli %arg1, %c256_i32 : i32
      %c0_i32_14 = arith.constant 0 : i32
      %16 = arith.addi %15, %c0_i32_14 : i32
      %17 = tpu.iota {dimensions = array<i32: 2>} : vector<1x32x128xi32>
      %18 = vector.broadcast %16 : i32 to vector<1x32x128xi32>
      %19 = arith.addi %17, %18 : vector<1x32x128xi32>
      %c272_i32 = arith.constant 272 : i32
      %20 = vector.broadcast %c272_i32 : i32 to vector<1x32x128xi32>
      %21 = arith.cmpi slt, %19, %20 : vector<1x32x128xi32>
      %c0_i32_15 = arith.constant 0 : i32
      %22 = arith.sitofp %c0_i32_15 : i32 to f32
      %23 = vector.broadcast %22 : f32 to vector<1x32x128xf32>
      %24 = arith.select %21, %14, %23 : vector<1x32x128xi1>, vector<1x32x128xf32>
      %cst = arith.constant 0xFF800000 : f32
      %25 = vector.broadcast %cst : f32 to vector<1x32x128xf32>
      %26 = arith.select %21, %14, %25 : vector<1x32x128xi1>, vector<1x32x128xf32>
      %27 = arith.addf %12, %24 : vector<1x32x128xf32>
      %28 = arith.maximumf %13, %26 : vector<1x32x128xf32>
      %c0_16 = arith.constant 0 : index
      %c0_17 = arith.constant 0 : index
      %c128 = arith.constant 128 : index
      %29 = vector.load %arg2[%c0_16, %c0_17, %c128] : memref<1x32x256xf32, #tpu.memory_space<vmem>>, vector<1x32x128xf32>
      %c256_i32_18 = arith.constant 256 : i32
      %30 = arith.muli %arg1, %c256_i32_18 : i32
      %c128_i32 = arith.constant 128 : i32
      %31 = arith.addi %30, %c128_i32 : i32
      %32 = tpu.iota {dimensions = array<i32: 2>} : vector<1x32x128xi32>
      %33 = vector.broadcast %31 : i32 to vector<1x32x128xi32>
      %34 = arith.addi %32, %33 : vector<1x32x128xi32>
      %c272_i32_19 = arith.constant 272 : i32
      %35 = vector.broadcast %c272_i32_19 : i32 to vector<1x32x128xi32>
      %36 = arith.cmpi slt, %34, %35 : vector<1x32x128xi32>
      %c0_i32_20 = arith.constant 0 : i32
      %37 = arith.sitofp %c0_i32_20 : i32 to f32
      %38 = vector.broadcast %37 : f32 to vector<1x32x128xf32>
      %39 = arith.select %36, %29, %38 : vector<1x32x128xi1>, vector<1x32x128xf32>
      %cst_21 = arith.constant 0xFF800000 : f32
      %40 = vector.broadcast %cst_21 : f32 to vector<1x32x128xf32>
      %41 = arith.select %36, %29, %40 : vector<1x32x128xi1>, vector<1x32x128xf32>
      %42 = arith.addf %27, %39 : vector<1x32x128xf32>
      %43 = arith.maximumf %28, %41 : vector<1x32x128xf32>
      %c0_22 = arith.constant 0 : index
      %c0_23 = arith.constant 0 : index
      %c0_24 = arith.constant 0 : index
      %44 = vector.load %arg6[%c0_22, %c0_23, %c0_24] : memref<1x32x128xf32, #tpu.memory_space<vmem>>, vector<1x32x128xf32>
      tpu.vector_store %arg6[%c0_22, %c0_23, %c0_24], %42 {strides = array<i32>} : memref<1x32x128xf32, #tpu.memory_space<vmem>>, vector<1x32x128xf32>,
      %c0_25 = arith.constant 0 : index
      %c0_26 = arith.constant 0 : index
      %c0_27 = arith.constant 0 : index
      %45 = vector.load %arg7[%c0_25, %c0_26, %c0_27] : memref<1x32x128xf32, #tpu.memory_space<vmem>>, vector<1x32x128xf32>
      tpu.vector_store %arg7[%c0_25, %c0_26, %c0_27], %43 {strides = array<i32>} : memref<1x32x128xf32, #tpu.memory_space<vmem>>, vector<1x32x128xf32>,
    } else {
    }
    %c1_i32_4 = arith.constant 1 : i32
    %9 = arith.cmpi eq, %arg1, %c1_i32_4 : i32
    %10 = arith.extui %9 : i1 to i32
    %c0_i32_5 = arith.constant 0 : i32
    %11 = arith.cmpi ne, %10, %c0_i32_5 : i32
    scf.if %11 {
      %c0 = arith.constant 0 : index
      %c0_6 = arith.constant 0 : index
      %c0_7 = arith.constant 0 : index
      %12 = vector.load %arg6[%c0, %c0_6, %c0_7] : memref<1x32x128xf32, #tpu.memory_space<vmem>>, vector<1x32x128xf32>
      %cst = arith.constant dense<0.000000e+00> : vector<1x32xf32>
      %13 = vector.multi_reduction <add>, %12, %cst [2] : vector<1x32x128xf32> to vector<1x32xf32>
      %cst_8 = arith.constant 0.0036764706 : f32
      %14 = vector.broadcast %cst_8 : f32 to vector<1x32xf32>
      %15 = arith.mulf %13, %14 : vector<1x32xf32>
      %c0_9 = arith.constant 0 : index
      %c0_10 = arith.constant 0 : index
      %c0_11 = arith.constant 0 : index
      %16 = vector.load %arg7[%c0_9, %c0_10, %c0_11] : memref<1x32x128xf32, #tpu.memory_space<vmem>>, vector<1x32x128xf32>
      %cst_12 = arith.constant dense<0xFF800000> : vector<1x32xf32>
      %17 = vector.multi_reduction <maximumf>, %16, %cst_12 [2] : vector<1x32x128xf32> to vector<1x32xf32>
      %18 = tpu.concatenate %15, %17 in 0 : vector<1x32xf32>, vector<1x32xf32> -> vector<2x32xf32>
      %c0_13 = arith.constant 0 : index
      %c0_14 = arith.constant 0 : index
      %19 = vector.load %arg3[%c0_13, %c0_14] : memref<32x4xf32, #tpu.memory_space<vmem>>, vector<32x4xf32>
      %cst_15 = arith.constant dense<0.000000e+00> : vector<2x4xf32>
      %20 = tpu.matmul %18, %19, %cst_15 {dimension_numbers = #tpu.dot_dimension_numbers<[1], [0], [0], [1], [0, 0, 1, 1], [], []>} : vector<2x32xf32>, vector<32x4xf32>, vector<2x4xf32> -> vector<2x4xf32>
      %cst_16 = arith.constant 0.000000e+00 : f32
      %21 = vector.broadcast %cst_16 : f32 to vector<2x4xf32>
      %22 = arith.maximumf %20, %21 : vector<2x4xf32>
      %c0_17 = arith.constant 0 : index
      %c0_18 = arith.constant 0 : index
      %23 = vector.load %arg4[%c0_17, %c0_18] : memref<4x32xf32, #tpu.memory_space<vmem>>, vector<4x32xf32>
      %cst_19 = arith.constant dense<0.000000e+00> : vector<2x32xf32>
      %24 = tpu.matmul %22, %23, %cst_19 {dimension_numbers = #tpu.dot_dimension_numbers<[1], [0], [0], [1], [0, 0, 1, 1], [], []>} : vector<2x4xf32>, vector<4x32xf32>, vector<2x32xf32> -> vector<2x32xf32>
      %25 = vector.extract_strided_slice %24 {offsets = [0, 0], sizes = [1, 32], strides = [1, 1]} : vector<2x32xf32> to vector<1x32xf32>
      %26 = vector.extract_strided_slice %24 {offsets = [1, 0], sizes = [1, 32], strides = [1, 1]} : vector<2x32xf32> to vector<1x32xf32>
      %27 = arith.addf %25, %26 : vector<1x32xf32>
      %28 = arith.negf %27 : vector<1x32xf32>
      %29 = math.exp %28 : vector<1x32xf32>
      %cst_20 = arith.constant 1.000000e+00 : f32
      %30 = vector.broadcast %cst_20 : f32 to vector<1x32xf32>
      %31 = arith.addf %30, %29 : vector<1x32xf32>
      %32 = arith.divf %30, %31 : vector<1x32xf32>
      %c0_21 = arith.constant 0 : index
      %c0_22 = arith.constant 0 : index
      %c0_23 = arith.constant 0 : index
      %33 = vector.load %arg5[%c0_21, %c0_22, %c0_23] : memref<1x1x32xf32, #tpu.memory_space<vmem>>, vector<1x1x32xf32>
      %34 = vector.shape_cast %33 : vector<1x1x32xf32> to vector<1x32xf32>
      %35 = vector.shape_cast %32 : vector<1x32xf32> to vector<1x1x32xf32>
      tpu.vector_store %arg5[%c0_21, %c0_22, %c0_23], %35 {strides = array<i32>} : memref<1x1x32xf32, #tpu.memory_space<vmem>>, vector<1x1x32xf32>,
    } else {
    }
    return
  }
  func.func @transform_0(%arg0: i32, %arg1: i32) -> (i32, i32, i32) {
    %c0_i32 = arith.constant 0 : i32
    %c0_i32_0 = arith.constant 0 : i32
    return %arg0, %c0_i32, %arg1 : i32, i32, i32
  }
  func.func @transform_1(%arg0: i32, %arg1: i32) -> (i32, i32) {
    %c0_i32 = arith.constant 0 : i32
    %c0_i32_0 = arith.constant 0 : i32
    %c0_i32_1 = arith.constant 0 : i32
    return %c0_i32, %c0_i32_0 : i32, i32
  }
  func.func @transform_2(%arg0: i32, %arg1: i32) -> (i32, i32) {
    %c0_i32 = arith.constant 0 : i32
    %c0_i32_0 = arith.constant 0 : i32
    %c0_i32_1 = arith.constant 0 : i32
    return %c0_i32, %c0_i32_0 : i32, i32
  }
  func.func @transform_3(%arg0: i32, %arg1: i32) -> (i32, i32, i32) {
    %c0_i32 = arith.constant 0 : i32
    %c0_i32_0 = arith.constant 0 : i32
    %c0_i32_1 = arith.constant 0 : i32
    return %arg0, %c0_i32, %c0_i32_0 : i32, i32, i32
  }
}

</mosaic_0001>

<llo_original>
// kernel: tpu_custom_call.1
$region0: #{tpu_custom_call.1}
  #allocation0 [shape = 'u32[]', space=smem, size = 0x4, offset = 0x4, fixed_abs, tag = 'smem constant byte address 0x4 - core index']
  #allocation1 [shape = 'u32[144,128]{1,0:T(1,128)}', space=vmem, size = 0x12000, scoped, tag = 'internal scratch']
  #allocation2 [shape = 'f32[1,32,128]{2,1,0:T(8,128)}', space=vmem, size = 0x4000, scoped, tag = 'scratch operand']
  #allocation3 [shape = 'f32[1,32,128]{2,1,0:T(8,128)}', space=vmem, size = 0x4000, scoped, tag = 'scratch operand']
  %s0 = inlined_call_operand.hbm [shape: f32[2,32,272], index: 0, kind: input, shape index: {}]
  %s1 = inlined_call_operand.vmem [shape: f32[32,4], index: 1, kind: input, shape index: {}]
  %s2 = inlined_call_operand.vmem [shape: f32[4,32], index: 2, kind: input, shape index: {}]
  %s3 = inlined_call_operand.hbm [shape: f32[2,1,32], index: 3, kind: output, shape index: {}]
  %s4 = sld [smem:[#allocation0]]
  $region61: #{tpu_custom_call.1} parent=0
    _
  %s6 = ssub.s32 1, %s4
  %s7 = scalar_select 0, %s6, %s4
  $region1: #{tpu_custom_call.1} parent=0
    #allocation4 [shape = 'u8[65536]{0}', space=vmem, size = 0x10000, scoped, tag = 'input window, operand 0']
    #allocation5 [shape = 's32[2]{0}', space=sflag, size = 0x8, scoped, tag = 'scoped memory for tpu_custom_call.1']
    #allocation6 [shape = 's32[2]{0}', space=sflag, size = 0x8, scoped, tag = 'scoped memory for tpu_custom_call.1']
    #allocation7 [shape = 'u8[1024]{0}', space=vmem, size = 0x400, scoped, tag = 'output window, operand 0']
    %8 = vsyncpa [#allocation5], 0
    %s9 = scalar_lea.sflag [#allocation5], 1
    %10 = vsyncpa %s9, 0
    %11 = vsyncpa [#allocation6], 0
    %s12 = scalar_lea.sflag [#allocation6], 1
    %13 = vsyncpa %s12, 0
    loop: start=0, step=1, limit=6
    $region2: #{tpu_custom_call.1} parent=1 // loop_pre_header
      _
    $region3: #{tpu_custom_call.1} parent=1 // loop_header
      %s15 = sphi 0, %s19
      %p16 = scmp.ge.s32.totalorder %s15, 6
      %s22 = sphi 0, %s34
      %s23 = sphi 0, %s30
      %s24 = sphi 0, %s22
      %s25 = sphi 0, %s23
      %s26 = sphi 0, %s24
      %s27 = sphi 0, %s25
      %s39 = sphi 0, %s41
      %s42 = sphi 0, %s39
      %s43 = sphi 0, %s42
      %s59 = sphi 0, %s43
      %s63 = sphi 0, %s63
      %s65 = sphi 0, %s63
      %s66 = sphi 0, %s65
      %s80 = sphi 0, %s66
      %s84 = sphi 0, %s84
      %s86 = sphi 0, %s84
      %s87 = sphi 0, %s86
      %s101 = sphi 0, %s87
      %s107 = sphi 0, %s109
      %s110 = sphi 0, %s107
      %s111 = sphi 0, %s110
      %s127 = sphi 0, %s111
    $region4: #{tpu_custom_call.1} parent=1 // loop_header_branch
      %18 = sbr.rel (%p16) target = $region8
    $region5: #{tpu_custom_call.1} parent=1 // loop_body
      %s20 = ssub.s32 %s15, 1
      %s21 = ssub.s32 %s15, 2
      %s28 = sadd.s32 1, %s23
      %p29 = scmp.ge.s32.totalorder %s28, 2
      %s30 = scalar_select %p29, 0, %s28
      %s31 = sadd.s32 1, %s22
      %s32 = scalar_select %p29, %s31, %s22
      %p33 = scmp.ge.s32.totalorder %s32, 2
      %s34 = scalar_select %p33, 0, %s32
      %s35 = ssub.s32 %s22, %s34
      %s36 = ssub.s32 %s23, %s30
      %s37 = sor.u32 %s35, %s36
      %p38 = scmp.eq.s32.totalorder %s37, 0
      %s40 = sadd.s32 %s39, 1
      %s41 = scalar_select %p38, %s39, %s40
      %p44 = pneg %p38
      %p45 = scmp.eq.s32.totalorder %s15, 3
      %p46 = por %p44, %p45
      %p47 = scmp.ne.s32.totalorder %s39, %s42
      %p48 = scmp.eq.s32.totalorder %s15, 0
      %p49 = por %p47, %p48
      %p50 = scmp.ne.s32.totalorder %s39, %s42
      %p51 = scmp.eq.s32.totalorder %s20, 3
      %p52 = por %p50, %p51
      %p53 = scmp.ne.s32.totalorder %s42, %s43
      %p54 = scmp.eq.s32.totalorder %s20, 0
      %p55 = por %p53, %p54
      %p56 = scmp.ne.s32.totalorder %s42, %s43
      %p57 = scmp.eq.s32.totalorder %s21, 3
      %p58 = por %p56, %p57
      %p60 = scmp.ne.s32.totalorder %s43, %s59
      %p61 = scmp.eq.s32.totalorder %s21, 0
      %p62 = por %p60, %p61
      %s64 = sadd.s32 %s63, 1
      %p67 = scmp.eq.s32.totalorder %s15, 3
      %p68 = scmp.ne.s32.totalorder %s63, %s65
      %p69 = scmp.eq.s32.totalorder %s15, 0
      %p70 = por %p68, %p69
      %p71 = scmp.ne.s32.totalorder %s63, %s65
      %p72 = scmp.eq.s32.totalorder %s20, 3
      %p73 = por %p71, %p72
      %p74 = scmp.ne.s32.totalorder %s65, %s66
      %p75 = scmp.eq.s32.totalorder %s20, 0
      %p76 = por %p74, %p75
      %p77 = scmp.ne.s32.totalorder %s65, %s66
      %p78 = scmp.eq.s32.totalorder %s21, 3
      %p79 = por %p77, %p78
      %p81 = scmp.ne.s32.totalorder %s66, %s80
      %p82 = scmp.eq.s32.totalorder %s21, 0
      %p83 = por %p81, %p82
      %s85 = sadd.s32 %s84, 1
      %p88 = scmp.eq.s32.totalorder %s15, 3
      %p89 = scmp.ne.s32.totalorder %s84, %s86
      %p90 = scmp.eq.s32.totalorder %s15, 0
      %p91 = por %p89, %p90
      %p92 = scmp.ne.s32.totalorder %s84, %s86
      %p93 = scmp.eq.s32.totalorder %s20, 3
      %p94 = por %p92, %p93
      %p95 = scmp.ne.s32.totalorder %s86, %s87
      %p96 = scmp.eq.s32.totalorder %s20, 0
      %p97 = por %p95, %p96
      %p98 = scmp.ne.s32.totalorder %s86, %s87
      %p99 = scmp.eq.s32.totalorder %s21, 3
      %p100 = por %p98, %p99
      %p102 = scmp.ne.s32.totalorder %s87, %s101
      %p103 = scmp.eq.s32.totalorder %s21, 0
      %p104 = por %p102, %p103
      %s105 = ssub.s32 %s22, %s34
      %p106 = scmp.eq.s32.totalorder %s105, 0
      %s108 = sadd.s32 %s107, 1
      %s109 = scalar_select %p106, %s107, %s108
      %p112 = pneg %p106
      %p113 = scmp.eq.s32.totalorder %s15, 3
      %p114 = por %p112, %p113
      %p115 = scmp.ne.s32.totalorder %s107, %s110
      %p116 = scmp.eq.s32.totalorder %s15, 0
      %p117 = por %p115, %p116
      %p118 = scmp.ne.s32.totalorder %s107, %s110
      %p119 = scmp.eq.s32.totalorder %s20, 3
      %p120 = por %p118, %p119
      %p121 = scmp.ne.s32.totalorder %s110, %s111
      %p122 = scmp.eq.s32.totalorder %s20, 0
      %p123 = por %p121, %p122
      %p124 = scmp.ne.s32.totalorder %s110, %s111
      %p125 = scmp.eq.s32.totalorder %s21, 3
      %p126 = por %p124, %p125
      %p128 = scmp.ne.s32.totalorder %s111, %s127
      %p129 = scmp.eq.s32.totalorder %s21, 0
      %p130 = por %p128, %p129
      %p131 = scmp.le.s32.totalorder 1, %s15
      %p132 = scmp.lt.s32.totalorder %s15, 5
      %p133 = pnand %p131, %p132
      %p134 = pneg %p133
      // Predicated region
      $region9: #{tpu_custom_call.1} parent=5 // pred_check
        _
      $region10: #{tpu_custom_call.1} parent=5 // pred_check_branch
        %136 = sbr.rel (%p133) target = $region12
      $region11: #{tpu_custom_call.1} parent=5 // pred_region
        %s137 = ssub.s32 %s15, 1
        // Predicated region
        $region13: #{tpu_custom_call.1} parent=11 // pred_check
          %p138 = pneg %p76
        $region14: #{tpu_custom_call.1} parent=11 // pred_check_branch
          %140 = sbr.rel (%p138) target = $region16
        $region15: #{tpu_custom_call.1} parent=11 // pred_region
          _
        $region16: #{tpu_custom_call.1} parent=11 // pred_fallthru
          _
        // Predicated region
        $region17: #{tpu_custom_call.1} parent=11 // pred_check
          %p141 = pneg %p97
        $region18: #{tpu_custom_call.1} parent=11 // pred_check_branch
          %143 = sbr.rel (%p141) target = $region20
        $region19: #{tpu_custom_call.1} parent=11 // pred_region
          _
        $region20: #{tpu_custom_call.1} parent=11 // pred_fallthru
          _
      $region12: #{tpu_custom_call.1} parent=5 // pred_fallthru
        _
      %p144 = scmp.lt.s32.totalorder %s15, 4
      // Predicated region
      $region21: #{tpu_custom_call.1} parent=5 // pred_check
        %p145 = pneg %p144
      $region22: #{tpu_custom_call.1} parent=5 // pred_check_branch
        %147 = sbr.rel (%p145) target = $region24
      $region23: #{tpu_custom_call.1} parent=5 // pred_region
        // Predicated region
        $region25: #{tpu_custom_call.1} parent=23 // pred_check
          %p148 = pneg %p49
        $region26: #{tpu_custom_call.1} parent=23 // pred_check_branch
          %150 = sbr.rel (%p148) target = $region28
        $region27: #{tpu_custom_call.1} parent=23 // pred_region
          %s151 = sand.u32 %s39, 1
          %s152 = scalar_lea.sflag [#allocation5], %s151
          %s153 = sand.u32 %s39, 1
          %s154 = smul.addr %s153, 64
          %s155 = scalar_lea.vmem [#allocation4], %s154
          %s156 = smul.u32 2, %s23
          %s157 = ssub.s32 3, %s156
          %p158 = scmp.lt.s32.totalorder %s157, 2
          %s159 = scalar_select %p158, %s157, 2
          %s160 = smul.u32 512, %s159
          %s162 = ssub.s32 1024, %s160
          %163 = vsyncadd %s152, %s162
          %p164 = scmp.ne.s32.totalorder 0, %s160
          %s165 = smul.addr %s22, 12
          %s166 = sadd.s32 %s156, %s165
          %s167 = smul.addr %s166, 128
          %s168 = scalar_lea.hbm %s0, %s167
          %s169 = smul.u32 %s159, 8
          %s170 = smul.u32 %s169, 4
          %s171 = sshll.u32 %s155, 4
          %s172 = int_to_ptr.vmem [resolvable:$true] %s171
          %s173 = sshll.u32 %s170, 4
          %177 = dma.hbm_to_vmem [thread:$0]  (%p164), %s168, %s173, %s172, %s152, 384, 256, %s169
        $region28: #{tpu_custom_call.1} parent=23 // pred_fallthru
          _
      $region24: #{tpu_custom_call.1} parent=5 // pred_fallthru
        _
      %p178 = scmp.le.s32.totalorder 1, %s15
      %p179 = scmp.lt.s32.totalorder %s15, 5
      %p180 = pnand %p178, %p179
      %p181 = pneg %p180
      // Predicated region
      $region29: #{tpu_custom_call.1} parent=5 // pred_check
        _
      $region30: #{tpu_custom_call.1} parent=5 // pred_check_branch
        %183 = sbr.rel (%p180) target = $region32
      $region31: #{tpu_custom_call.1} parent=5 // pred_region
        %s184 = ssub.s32 %s15, 1
        %s185 = sand.u32 %s42, 1
        %s186 = scalar_lea.sflag [#allocation5], %s185
        %s187 = sand.u32 %s42, 1
        %s188 = smul.addr %s187, 64
        %s189 = scalar_lea.vmem [#allocation4], %s188
        // Predicated region
        $region33: #{tpu_custom_call.1} parent=31 // pred_check
          %p190 = pneg %p55
        $region34: #{tpu_custom_call.1} parent=31 // pred_check_branch
          %192 = sbr.rel (%p190) target = $region36
        $region35: #{tpu_custom_call.1} parent=31 // pred_region
          %193 = dma.done %s186, 1024
        $region36: #{tpu_custom_call.1} parent=31 // pred_fallthru
          _
        %s194 = sand.u32 %s42, 1
        %s195 = scalar_lea.sflag [#allocation5], %s194
        %s196 = sand.u32 %s42, 1
        %s197 = smul.addr %s196, 64
        %s198 = scalar_lea.vmem [#allocation4], %s197
        %p199 = pneg %p55
        %p200 = pneg %p52
        %p201 = pneg %p76
        %p202 = pneg %p73
        %p203 = pneg %p97
        %p204 = pneg %p94
        %p205 = pneg %p123
        %p206 = pneg %p120
        %s207 = sand.u32 %s110, 1
        %s208 = scalar_lea.sflag [#allocation6], %s207
        %s209 = sand.u32 %s110, 1
        %s210 = scalar_lea.vmem [#allocation7], %s209
        %s211 = smul.u32 2, %s25
        %s212 = ssub.s32 3, %s211
        %p213 = scmp.lt.s32.totalorder %s212, 2
        %s214 = scalar_select %p213, %s212, 2
        %s215 = smul.u32 512, %s214
        %p216 = scmp.eq.s32.totalorder %s25, 0
        // Predicated region
        $region37: #{tpu_custom_call.1} parent=31 // pred_check
          %p217 = pneg %p216
        $region38: #{tpu_custom_call.1} parent=31 // pred_check_branch
          %219 = sbr.rel (%p217) target = $region40
        $region39: #{tpu_custom_call.1} parent=31 // pred_region
          %220 = vst [vmem:[#allocation2] sm:$0xff] 0.0
          %221 = vst [vmem:[#allocation2 + $0x8] sm:$0xff] 0.0
          %222 = vst [vmem:[#allocation2 + $0x10] sm:$0xff] 0.0
          %223 = vst [vmem:[#allocation2 + $0x18] sm:$0xff] 0.0
          %224 = vst [vmem:[#allocation3] sm:$0xff] -inf
          %225 = vst [vmem:[#allocation3 + $0x8] sm:$0xff] -inf
          %226 = vst [vmem:[#allocation3 + $0x10] sm:$0xff] -inf
          %227 = vst [vmem:[#allocation3 + $0x18] sm:$0xff] -inf
        $region40: #{tpu_custom_call.1} parent=31 // pred_fallthru
          _
        %p228 = scmp.ne.s32.totalorder %s25, 1
        // Predicated region
        $region41: #{tpu_custom_call.1} parent=31 // pred_check
          %p229 = pneg %p228
        $region42: #{tpu_custom_call.1} parent=31 // pred_check_branch
          %231 = sbr.rel (%p229) target = $region44
        $region43: #{tpu_custom_call.1} parent=31 // pred_region
          %v232 = vld [vmem:[#allocation2] sm:$0xff]
          %v233 = vld [vmem:[#allocation2 + $0x8] sm:$0xff]
          %v234 = vld [vmem:[#allocation2 + $0x10] sm:$0xff]
          %v235 = vld [vmem:[#allocation2 + $0x18] sm:$0xff]
          %v236 = vld [vmem:[#allocation3] sm:$0xff]
          %v237 = vld [vmem:[#allocation3 + $0x8] sm:$0xff]
          %v238 = vld [vmem:[#allocation3 + $0x10] sm:$0xff]
          %v239 = vld [vmem:[#allocation3 + $0x18] sm:$0xff]
          %v240 = vld [vmem:[%s189] sm:$0xff]
          %v241 = vld [vmem:[%s189 + $0x10] sm:$0xff]
          %v242 = vld [vmem:[%s189 + $0x20] sm:$0xff]
          %v243 = vld [vmem:[%s189 + $0x30] sm:$0xff]
          %v244 = vadd.f32 %v232, %v240
          %v245 = vadd.f32 %v233, %v241
          %v246 = vadd.f32 %v234, %v242
          %v247 = vadd.f32 %v235, %v243
          %v248 = vmax.f32 %v236, %v240
          %v249 = vmax.f32 %v237, %v241
          %v250 = vmax.f32 %v238, %v242
          %v251 = vmax.f32 %v239, %v243
          %v252 = vld [vmem:[%s189 + $0x8] sm:$0xff]
          %v253 = vld [vmem:[%s189 + $0x18] sm:$0xff]
          %v254 = vld [vmem:[%s189 + $0x28] sm:$0xff]
          %v255 = vld [vmem:[%s189 + $0x38] sm:$0xff]
          %v256 = vadd.f32 %v244, %v252
          %v257 = vadd.f32 %v245, %v253
          %v258 = vadd.f32 %v246, %v254
          %v259 = vadd.f32 %v247, %v255
          %v260 = vmax.f32 %v248, %v252
          %v261 = vmax.f32 %v249, %v253
          %v262 = vmax.f32 %v250, %v254
          %v263 = vmax.f32 %v251, %v255
          %264 = vst [vmem:[#allocation2] sm:$0xff] %v256
          %265 = vst [vmem:[#allocation2 + $0x8] sm:$0xff] %v257
          %266 = vst [vmem:[#allocation2 + $0x10] sm:$0xff] %v258
          %267 = vst [vmem:[#allocation2 + $0x18] sm:$0xff] %v259
          %268 = vst [vmem:[#allocation3] sm:$0xff] %v260
          %269 = vst [vmem:[#allocation3 + $0x8] sm:$0xff] %v261
          %270 = vst [vmem:[#allocation3 + $0x10] sm:$0xff] %v262
          %271 = vst [vmem:[#allocation3 + $0x18] sm:$0xff] %v263
        $region44: #{tpu_custom_call.1} parent=31 // pred_fallthru
          _
        %p272 = scmp.eq.s32.totalorder %s25, 1
        // Predicated region
        $region45: #{tpu_custom_call.1} parent=31 // pred_check
          %p273 = pneg %p272
        $region46: #{tpu_custom_call.1} parent=31 // pred_check_branch
          %275 = sbr.rel (%p273) target = $region48
        $region47: #{tpu_custom_call.1} parent=31 // pred_region
          %v276 = vld [vmem:[#allocation2] sm:$0xff]
          %v277 = vld [vmem:[#allocation2 + $0x8] sm:$0xff]
          %v278 = vld [vmem:[#allocation2 + $0x10] sm:$0xff]
          %v279 = vld [vmem:[#allocation2 + $0x18] sm:$0xff]
          %v280 = vld [vmem:[#allocation3] sm:$0xff]
          %v281 = vld [vmem:[#allocation3 + $0x8] sm:$0xff]
          %v282 = vld [vmem:[#allocation3 + $0x10] sm:$0xff]
          %v283 = vld [vmem:[#allocation3 + $0x18] sm:$0xff]
          %v284 = vld [vmem:[%s189] sm:$0xff]
          %v285 = vld [vmem:[%s189 + $0x10] sm:$0xff]
          %v286 = vld [vmem:[%s189 + $0x20] sm:$0xff]
          %v287 = vld [vmem:[%s189 + $0x30] sm:$0xff]
          %s288 = smul.u32 %s25, 256
          %v289 = vlaneseq
          %v290 = vand.u32 %v289, 127
          %v291 = vstv %s288
          %v292 = vadd.s32 %v290, %v291
          %vm293 = vcmp.lt.s32.totalorder %v292, 272
          %v294 = vsel %vm293, %v284, 0.0
          %v295 = vsel %vm293, %v285, 0.0
          %v296 = vsel %vm293, %v286, 0.0
          %v297 = vsel %vm293, %v287, 0.0
          %v298 = vsel %vm293, %v284, -inf
          %v299 = vsel %vm293, %v285, -inf
          %v300 = vsel %vm293, %v286, -inf
          %v301 = vsel %vm293, %v287, -inf
          %v302 = vadd.f32 %v276, %v294
          %v303 = vadd.f32 %v277, %v295
          %v304 = vadd.f32 %v278, %v296
          %v305 = vadd.f32 %v279, %v297
          %v306 = vmax.f32 %v280, %v298
          %v307 = vmax.f32 %v281, %v299
          %v308 = vmax.f32 %v282, %v300
          %v309 = vmax.f32 %v283, %v301
          %v310 = vld [vmem:[%s189 + $0x8] sm:$0xff]
          %v311 = vld [vmem:[%s189 + $0x18] sm:$0xff]
          %v312 = vld [vmem:[%s189 + $0x28] sm:$0xff]
          %v313 = vld [vmem:[%s189 + $0x38] sm:$0xff]
          %s314 = sadd.s32 %s288, 128
          %v315 = vstv %s314
          %v316 = vadd.s32 %v290, %v315
          %vm317 = vcmp.lt.s32.totalorder %v316, 272
          %v318 = vsel %vm317, %v310, 0.0
          %v319 = vsel %vm317, %v311, 0.0
          %v320 = vsel %vm317, %v312, 0.0
          %v321 = vsel %vm317, %v313, 0.0
          %v322 = vsel %vm317, %v310, -inf
          %v323 = vsel %vm317, %v311, -inf
          %v324 = vsel %vm317, %v312, -inf
          %v325 = vsel %vm317, %v313, -inf
          %v326 = vadd.f32 %v302, %v318
          %v327 = vadd.f32 %v303, %v319
          %v328 = vadd.f32 %v304, %v320
          %v329 = vadd.f32 %v305, %v321
          %v330 = vmax.f32 %v306, %v322
          %v331 = vmax.f32 %v307, %v323
          %v332 = vmax.f32 %v308, %v324
          %v333 = vmax.f32 %v309, %v325
          %334 = vst [vmem:[#allocation2] sm:$0xff] %v326
          %335 = vst [vmem:[#allocation2 + $0x8] sm:$0xff] %v327
          %336 = vst [vmem:[#allocation2 + $0x10] sm:$0xff] %v328
          %337 = vst [vmem:[#allocation2 + $0x18] sm:$0xff] %v329
          %338 = vst [vmem:[#allocation3] sm:$0xff] %v330
          %339 = vst [vmem:[#allocation3 + $0x8] sm:$0xff] %v331
          %340 = vst [vmem:[#allocation3 + $0x10] sm:$0xff] %v332
          %341 = vst [vmem:[#allocation3 + $0x18] sm:$0xff] %v333
          %v342 = vld [vmem:[#allocation2] sm:$0xff]
          %v343 = vld [vmem:[#allocation2 + $0x8] sm:$0xff]
          %v344 = vld [vmem:[#allocation2 + $0x10] sm:$0xff]
          %v345 = vld [vmem:[#allocation2 + $0x18] sm:$0xff]
          %346 = vadd.xlane.f32.xlu0 %v342
          %v347 = vpop.xlane.xlu0 %346
          %348 = vadd.xlane.f32.xlu0 %v343
          %v349 = vpop.xlane.xlu0 %348
          %350 = vadd.xlane.f32.xlu0 %v344
          %v351 = vpop.xlane.xlu0 %350
          %352 = vadd.xlane.f32.xlu0 %v345
          %v353 = vpop.xlane.xlu0 %352
          %v354 = vmul.f32 %v347, 0.0036764706
          %v355 = vmul.f32 %v349, 0.0036764706
          %v356 = vmul.f32 %v351, 0.0036764706
          %v357 = vmul.f32 %v353, 0.0036764706
          %v358 = vld [vmem:[#allocation3] sm:$0xff]
          %v359 = vld [vmem:[#allocation3 + $0x8] sm:$0xff]
          %v360 = vld [vmem:[#allocation3 + $0x10] sm:$0xff]
          %v361 = vld [vmem:[#allocation3 + $0x18] sm:$0xff]
          %362 = vmax.xlane.f32.xlu0 %v358
          %v363 = vpop.xlane.xlu0 %362
          %364 = vmax.xlane.f32.xlu0 %v359
          %v365 = vpop.xlane.xlu0 %364
          %366 = vmax.xlane.f32.xlu0 %v360
          %v367 = vpop.xlane.xlu0 %366
          %368 = vmax.xlane.f32.xlu0 %v361
          %v369 = vpop.xlane.xlu0 %368
          %v374 = vlaneseq
          %v375 = vshrl.u32 %v374, 7
          %v376 = vsub.s32 %v290, %v375
          %v377 = vrot.slane %v354, %v376
          %v378 = vadd.s32 %v290, 4294967288
          %v379 = vlaneseq
          %v380 = vshrl.u32 %v379, 7
          %v381 = vsub.s32 %v378, %v380
          %v382 = vrot.slane %v355, %v381
          %vm383 = vcmask 130112
          %v384 = vsel %vm383, %v382, %v377
          %v385 = vadd.s32 %v290, 4294967280
          %v386 = vlaneseq
          %v387 = vshrl.u32 %v386, 7
          %v388 = vsub.s32 %v385, %v387
          %v389 = vrot.slane %v356, %v388
          %vm390 = vcmask 195712
          %v391 = vsel %vm390, %v389, %v384
          %v392 = vadd.s32 %v290, 4294967272
          %v393 = vlaneseq
          %v394 = vshrl.u32 %v393, 7
          %v395 = vsub.s32 %v392, %v394
          %v396 = vrot.slane %v357, %v395
          %vm397 = vcmask 261312
          %v398 = vsel %vm397, %v396, %v391
          %v404 = vlaneseq
          %v405 = vshrl.u32 %v404, 7
          %v406 = vsub.s32 %v290, %v405
          %v407 = vrot.slane %v363, %v406
          %v408 = vlaneseq
          %v409 = vshrl.u32 %v408, 7
          %v410 = vsub.s32 %v378, %v409
          %v411 = vrot.slane %v365, %v410
          %v412 = vsel %vm383, %v411, %v407
          %v413 = vlaneseq
          %v414 = vshrl.u32 %v413, 7
          %v415 = vsub.s32 %v385, %v414
          %v416 = vrot.slane %v367, %v415
          %v417 = vsel %vm390, %v416, %v412
          %v418 = vlaneseq
          %v419 = vshrl.u32 %v418, 7
          %v420 = vsub.s32 %v392, %v419
          %v421 = vrot.slane %v369, %v420
          %v422 = vsel %vm397, %v421, %v417
          %vm424 = vcmask 1040384
          %v425 = vsel %vm424, %v398, %v422
          %v426 = vld [vmem:[%s1] sm:$0xff]
          %v427 = vld [vmem:[%s1 + $0x8] sm:$0xff]
          %v428 = vld [vmem:[%s1 + $0x10] sm:$0xff]
          %v429 = vld [vmem:[%s1 + $0x18] sm:$0xff]
          %vm430 = vcmask 261120
          %v432 = vsel %vm430, %v425, 0
          %434 = vmatprep.subr.mxu0 0.0
          %435 = vmatpush1.msra.mxu0 %v426
          %436 = vmatprep.subr.mxu0 0.0
          %437 = vmatpush1.msra.mxu0 %v427
          %438 = vmatprep.subr.mxu0 0.0
          %439 = vmatpush1.msra.mxu0 %v428
          %440 = vmatprep.subr.mxu0 0.0
          %441 = vmatpush1.msra.mxu0 %v429
          %442 = vmatprep.subr.mxu0 0.0
          %443 = vmatpush1.msra.mxu0 0.0
          %444 = vmatprep.subr.mxu0 0.0
          %445 = vmatpush1.msra.mxu0 0.0
          %446 = vmatprep.subr.mxu0 0.0
          %447 = vmatpush1.msra.mxu0 0.0
          %448 = vmatprep.subr.mxu0 0.0
          %449 = vmatpush1.msra.mxu0 0.0
          %450 = vmatprep.subr.mxu0 0.0
          %451 = vmatpush1.msra.mxu0 0.0
          %452 = vmatprep.subr.mxu0 0.0
          %453 = vmatpush1.msra.mxu0 0.0
          %454 = vmatprep.subr.mxu0 0.0
          %455 = vmatpush1.msra.mxu0 0.0
          %456 = vmatprep.subr.mxu0 0.0
          %457 = vmatpush1.msra.mxu0 0.0
          %458 = vmatprep.subr.mxu0 0.0
          %459 = vmatpush1.msra.mxu0 0.0
          %460 = vmatprep.subr.mxu0 0.0
          %461 = vmatpush1.msra.mxu0 0.0
          %462 = vmatprep.subr.mxu0 0.0
          %463 = vmatpush1.msra.mxu0 0.0
          %464 = vmatprep.subr.mxu0 0.0
          %465 = vmatpush1.msra.mxu0 0.0
          %466 = vmatprep.subr.mxu0 0.0
          %467 = vmatpush1.msra.mxu0 0.0
          %468 = vmatprep.subr.mxu0 0.0
          %469 = vmatpush1.msra.mxu0 0.0
          %470 = vmatprep.subr.mxu0 0.0
          %471 = vmatpush1.msra.mxu0 0.0
          %472 = vmatprep.subr.mxu0 0.0
          %473 = vmatpush1.msra.mxu0 0.0
          %474 = vmatprep.subr.mxu0 0.0
          %475 = vmatpush1.msra.mxu0 0.0
          %476 = vmatprep.subr.mxu0 0.0
          %477 = vmatpush1.msra.mxu0 0.0
          %478 = vmatprep.subr.mxu0 0.0
          %479 = vmatpush1.msra.mxu0 0.0
          %480 = vmatprep.subr.mxu0 0.0
          %481 = vmatpush1.msra.mxu0 0.0
          %482 = vmatprep.subr.mxu0 0.0
          %483 = vmatpush1.msra.mxu0 0.0
          %484 = vmatprep.subr.mxu0 0.0
          %485 = vmatpush1.msra.mxu0 0.0
          %486 = vmatprep.subr.mxu0 0.0
          %487 = vmatpush1.msra.mxu0 0.0
          %488 = vmatprep.subr.mxu0 0.0
          %489 = vmatpush1.msra.mxu0 0.0
          %490 = vmatprep.subr.mxu0 0.0
          %491 = vmatpush1.msra.mxu0 0.0
          %492 = vmatprep.subr.mxu0 0.0
          %493 = vmatpush1.msra.mxu0 0.0
          %494 = vmatprep.subr.mxu0 0.0
          %495 = vmatpush1.msra.mxu0 0.0
          %496 = vmatprep.subr.mxu0 0.0
          %497 = vmatpush1.msra.mxu0 0.0
          %498 = vmatprep.mubr.f32.mxu0 0.0
          %499 = vmatmul.mubr.f32.gmra.mrb[0].mxu0 %v432
          %v500 = vpop.f32.mrb[0].mxu0
          %v501 = vadd.f32 0.0, %v500
          %v502 = vpop.f32.mrb[0].mxu0
          %503 = vdwg.mxu0
          %v504 = vmax.f32 %v501, 0.0
          %v505 = vld [vmem:[%s2] sm:$0xf]
          %vm506 = vcmask 31744
          %v508 = vsel %vm506, %v504, 0
          %vm510 = vcmask 1043456
          %v512 = vsel %vm510, %v505, 0
          %514 = vmatprep.subr.mxu0 0.0
          %515 = vmatpush1.msra.mxu0 %v512
          %516 = vmatprep.subr.mxu0 0.0
          %517 = vmatpush1.msra.mxu0 0.0
          %518 = vmatprep.subr.mxu0 0.0
          %519 = vmatpush1.msra.mxu0 0.0
          %520 = vmatprep.subr.mxu0 0.0
          %521 = vmatpush1.msra.mxu0 0.0
          %522 = vmatprep.subr.mxu0 0.0
          %523 = vmatpush1.msra.mxu0 0.0
          %524 = vmatprep.subr.mxu0 0.0
          %525 = vmatpush1.msra.mxu0 0.0
          %526 = vmatprep.subr.mxu0 0.0
          %527 = vmatpush1.msra.mxu0 0.0
          %528 = vmatprep.subr.mxu0 0.0
          %529 = vmatpush1.msra.mxu0 0.0
          %530 = vmatprep.subr.mxu0 0.0
          %531 = vmatpush1.msra.mxu0 0.0
          %532 = vmatprep.subr.mxu0 0.0
          %533 = vmatpush1.msra.mxu0 0.0
          %534 = vmatprep.subr.mxu0 0.0
          %535 = vmatpush1.msra.mxu0 0.0
          %536 = vmatprep.subr.mxu0 0.0
          %537 = vmatpush1.msra.mxu0 0.0
          %538 = vmatprep.subr.mxu0 0.0
          %539 = vmatpush1.msra.mxu0 0.0
          %540 = vmatprep.subr.mxu0 0.0
          %541 = vmatpush1.msra.mxu0 0.0
          %542 = vmatprep.subr.mxu0 0.0
          %543 = vmatpush1.msra.mxu0 0.0
          %544 = vmatprep.subr.mxu0 0.0
          %545 = vmatpush1.msra.mxu0 0.0
          %546 = vmatprep.subr.mxu0 0.0
          %547 = vmatpush1.msra.mxu0 0.0
          %548 = vmatprep.subr.mxu0 0.0
          %549 = vmatpush1.msra.mxu0 0.0
          %550 = vmatprep.subr.mxu0 0.0
          %551 = vmatpush1.msra.mxu0 0.0
          %552 = vmatprep.subr.mxu0 0.0
          %553 = vmatpush1.msra.mxu0 0.0
          %554 = vmatprep.subr.mxu0 0.0
          %555 = vmatpush1.msra.mxu0 0.0
          %556 = vmatprep.subr.mxu0 0.0
          %557 = vmatpush1.msra.mxu0 0.0
          %558 = vmatprep.subr.mxu0 0.0
          %559 = vmatpush1.msra.mxu0 0.0
          %560 = vmatprep.subr.mxu0 0.0
          %561 = vmatpush1.msra.mxu0 0.0
          %562 = vmatprep.subr.mxu0 0.0
          %563 = vmatpush1.msra.mxu0 0.0
          %564 = vmatprep.subr.mxu0 0.0
          %565 = vmatpush1.msra.mxu0 0.0
          %566 = vmatprep.subr.mxu0 0.0
          %567 = vmatpush1.msra.mxu0 0.0
          %568 = vmatprep.subr.mxu0 0.0
          %569 = vmatpush1.msra.mxu0 0.0
          %570 = vmatprep.subr.mxu0 0.0
          %571 = vmatpush1.msra.mxu0 0.0
          %572 = vmatprep.subr.mxu0 0.0
          %573 = vmatpush1.msra.mxu0 0.0
          %574 = vmatprep.subr.mxu0 0.0
          %575 = vmatpush1.msra.mxu0 0.0
          %576 = vmatprep.subr.mxu0 0.0
          %577 = vmatpush1.msra.mxu0 0.0
          %578 = vmatprep.mubr.f32.mxu0 0.0
          %579 = vmatmul.mubr.f32.gmra.mrb[0].mxu0 %v508
          %v580 = vpop.f32.mrb[0].mxu0
          %v581 = vadd.f32 0.0, %v580
          %v582 = vpop.f32.mrb[0].mxu0
          %583 = vdwg.mxu0
          %v585 = vrot.slane %v581, 1
          %v587 = vadd.f32 %v581, %v585
          %v588 = vxor.u32 %v587, 2147483648
          %v589 = vmul.f32 %v588, 1.442695
          %v590 = vpow.pop %v589
          %v591 = vadd.f32 %v590, 1.0
          %v592 = vrcp.pop %v591
          %v593 = vmul.f32 1.0, %v592
          %vm594 = vcmask 253952
          %595 = vst.msk [vmem:[%s210] sm:$0x1] %vm594, %v593
        $region48: #{tpu_custom_call.1} parent=31 // pred_fallthru
          _
        %s596 = sand.u32 %s110, 1
        %s597 = scalar_lea.sflag [#allocation6], %s596
        %s598 = sand.u32 %s110, 1
        %s599 = scalar_lea.vmem [#allocation7], %s598
        // Predicated region
        $region49: #{tpu_custom_call.1} parent=31 // pred_check
          %p600 = pneg %p120
        $region50: #{tpu_custom_call.1} parent=31 // pred_check_branch
          %602 = sbr.rel (%p600) target = $region52
        $region51: #{tpu_custom_call.1} parent=31 // pred_region
          %s604 = ssub.s32 16, 16
          %605 = vsyncadd %s597, %s604
          %s606 = smul.addr %s24, 16
          %s607 = scalar_lea.hbm %s3, %s606
          %s609 = sshll.u32 %s599, 4
          %s610 = int_to_ptr.vmem [resolvable:$true] %s609
          %612 = dma.vmem_to_hbm [thread:$0]  %s610, 16, %s607, %s597
        $region52: #{tpu_custom_call.1} parent=31 // pred_fallthru
          _
      $region32: #{tpu_custom_call.1} parent=5 // pred_fallthru
        _
      %p613 = scmp.le.s32.totalorder 2, %s15
      // Predicated region
      $region53: #{tpu_custom_call.1} parent=5 // pred_check
        %p614 = pneg %p613
      $region54: #{tpu_custom_call.1} parent=5 // pred_check_branch
        %616 = sbr.rel (%p614) target = $region56
      $region55: #{tpu_custom_call.1} parent=5 // pred_region
        %s617 = ssub.s32 %s15, 2
        // Predicated region
        $region57: #{tpu_custom_call.1} parent=55 // pred_check
          %p618 = pneg %p126
        $region58: #{tpu_custom_call.1} parent=55 // pred_check_branch
          %620 = sbr.rel (%p618) target = $region60
        $region59: #{tpu_custom_call.1} parent=55 // pred_region
          %s621 = sand.u32 %s111, 1
          %s622 = scalar_lea.sflag [#allocation6], %s621
          %s623 = sand.u32 %s111, 1
          %s624 = scalar_lea.vmem [#allocation7], %s623
          %625 = dma.done %s622, 16
        $region60: #{tpu_custom_call.1} parent=55 // pred_fallthru
          _
      $region56: #{tpu_custom_call.1} parent=5 // pred_fallthru
        _
    $region6: #{tpu_custom_call.1} parent=1 // loop_footer
      %s19 = sadd.s32 1, %s15
    $region7: #{tpu_custom_call.1} parent=1 // loop_footer_branch
      %14 = sbr.rel target = $region3
    $region8: #{tpu_custom_call.1} parent=1 // loop_exit
      _
    %626 = vsyncpa [#allocation5], 1
    %s627 = scalar_lea.sflag [#allocation5], 1
    %628 = vsyncpa %s627, 1
    %629 = vsyncpa [#allocation6], 1
    %s630 = scalar_lea.sflag [#allocation6], 1
    %631 = vsyncpa %s630, 1

</llo_original>
